<compile_context>
chip_gen: v7x
topology: tpu7x:2x2x1
jax: 0.10.0
libtpu: 0.0.40
codegen_flags: <defaults>
</compile_context>

<pallas_src>
import functools
import math

import jax
import jax.numpy as jnp
from jax.experimental import pallas as pl
from jax.experimental.pallas import tpu as pltpu


# ---------------------------------------------------------------------------
# Kernel 1: fused QKV projection.  x(tile,D) @ Wqkv(D,3D) + b, split into Q and K|V.
# ---------------------------------------------------------------------------
def _qkv_kernel(x_ref, w_ref, b_ref, q_ref, kv_ref):
    d = q_ref.shape[-1]
    acc = jnp.dot(x_ref[0], w_ref[...], preferred_element_type=jnp.float32)
    acc = acc + b_ref[...]                       # bias add in f32
    acc = acc.astype(q_ref.dtype)
    q_ref[0] = acc[:, :d]
    kv_ref[0] = acc[:, d:]


# ---------------------------------------------------------------------------
# Kernel 2: flash-style multi-head attention with fused output projection.
# grid = (B, num_q_tiles, num_kv_tiles); kv axis is the (sequential) reduction axis.
# ---------------------------------------------------------------------------
def _mha_body(q_ref, kv_ref, wo_ref, bo_ref, o_ref, m_sc, l_sc, acc_sc,
              *, num_heads, mask=None):
    ki = pl.program_id(2)
    d = o_ref.shape[-1]
    dh = d // num_heads
    scale = 1.0 / math.sqrt(dh)

    @pl.when(ki == 0)
    def _():
        m_sc[...] = jnp.full_like(m_sc, -jnp.inf)
        l_sc[...] = jnp.zeros_like(l_sc)
        acc_sc[...] = jnp.zeros_like(acc_sc)

    q_all = q_ref[0]                 # (tq, D)  compute dtype
    k_all = kv_ref[0][:, :d]         # (tk, D)
    v_all = kv_ref[0][:, d:]         # (tk, D)

    for h in range(num_heads):       # static, small; each matmul is (tq,dh)x(dh,tk)
        sl = slice(h * dh, (h + 1) * dh)
        s = jnp.einsum('qd,kd->qk', q_all[:, sl], k_all[:, sl],
                       preferred_element_type=jnp.float32) * scale      # f32 scores
        if mask is not None:
            s = jnp.where(mask > 0.0, s, -1e9)

        m_prev = m_sc[:, h:h + 1]
        m_new = jnp.maximum(m_prev, jnp.max(s, axis=-1, keepdims=True))
        alpha = jnp.exp(m_prev - m_new)
        p = jnp.exp(s - m_new)
        l_sc[:, h:h + 1] = alpha * l_sc[:, h:h + 1] + jnp.sum(p, axis=-1, keepdims=True)
        acc_sc[:, sl] = alpha * acc_sc[:, sl] + jnp.dot(
            p.astype(v_all.dtype), v_all[:, sl], preferred_element_type=jnp.float32)
        m_sc[:, h:h + 1] = m_new

    @pl.when(ki == pl.num_programs(2) - 1)
    def _():
        # normalize per head; heads are already laid out contiguously -> "concat" is free
        pieces = [acc_sc[:, h * dh:(h + 1) * dh] / l_sc[:, h:h + 1]
                  for h in range(num_heads)]
        ctx = jnp.concatenate(pieces, axis=-1)                           # (tq, D) f32
        out = jnp.dot(ctx.astype(wo_ref.dtype), wo_ref[...],
                      preferred_element_type=jnp.float32) + bo_ref[...]
        o_ref[0] = out.astype(o_ref.dtype)


def _mha_kernel_nomask(q_ref, kv_ref, wo_ref, bo_ref, o_ref, m_sc, l_sc, acc_sc,
                       *, num_heads):
    _mha_body(q_ref, kv_ref, wo_ref, bo_ref, o_ref, m_sc, l_sc, acc_sc,
              num_heads=num_heads, mask=None)


def _mha_kernel_mask(q_ref, kv_ref, mask_ref, wo_ref, bo_ref, o_ref, m_sc, l_sc, acc_sc,
                     *, num_heads):
    _mha_body(q_ref, kv_ref, wo_ref, bo_ref, o_ref, m_sc, l_sc, acc_sc,
              num_heads=num_heads, mask=mask_ref[0])


# ---------------------------------------------------------------------------
# Wrapper
# ---------------------------------------------------------------------------
def self_attention_forward(x, params, mask=None, *, num_heads,
                           block_q=128, block_kv=128, block_m=128,
                           compute_dtype=jnp.float32):
    """SelfAttention.forward(x, mask) == MHA([x, x, x], mask)."""
    B, S, D = x.shape
    assert D % num_heads == 0

    xw = x.astype(compute_dtype)
    wqkv = params["wqkv"].astype(compute_dtype)                 # (D, 3D)
    bqkv = params["bqkv"].reshape(1, 3 * D).astype(jnp.float32)
    wo = params["wo"].astype(compute_dtype)                     # (D, D)
    bo = params["bo"].reshape(1, D).astype(jnp.float32)

    # ---- fused QKV projection ------------------------------------------------
    tm = min(block_m, S)
    assert S % tm == 0 and tm % 8 == 0
    q_proj, kv_proj = pl.pallas_call(
        _qkv_kernel,
        out_shape=(jax.ShapeDtypeStruct((B, S, D), compute_dtype),
                   jax.ShapeDtypeStruct((B, S, 2 * D), compute_dtype)),
        grid=(B, S // tm),
        in_specs=[
            pl.BlockSpec((1, tm, D), lambda b, m: (b, m, 0)),
            pl.BlockSpec((D, 3 * D), lambda b, m: (0, 0)),
            pl.BlockSpec((1, 3 * D), lambda b, m: (0, 0)),
        ],
        out_specs=(pl.BlockSpec((1, tm, D), lambda b, m: (b, m, 0)),
                   pl.BlockSpec((1, tm, 2 * D), lambda b, m: (b, m, 0))),
        compiler_params=pltpu.CompilerParams(
            dimension_semantics=("parallel", "parallel")),
    )(xw, wqkv, bqkv)

    # ---- attention + output projection ---------------------------------------
    tq = min(block_q, S)
    tk = min(block_kv, S)
    assert S % tq == 0 and S % tk == 0 and tq % 8 == 0 and tk % 128 == 0 or tk == S
    grid = (B, S // tq, S // tk)

    q_spec = pl.BlockSpec((1, tq, D), lambda b, qi, ki: (b, qi, 0))
    kv_spec = pl.BlockSpec((1, tk, 2 * D), lambda b, qi, ki: (b, ki, 0))
    wo_spec = pl.BlockSpec((D, D), lambda b, qi, ki: (0, 0))
    bo_spec = pl.BlockSpec((1, D), lambda b, qi, ki: (0, 0))
    out_spec = pl.BlockSpec((1, tq, D), lambda b, qi, ki: (b, qi, 0))
    scratch = [pltpu.VMEM((tq, num_heads), jnp.float32),   # running max  m
               pltpu.VMEM((tq, num_heads), jnp.float32),   # running sum  l
               pltpu.VMEM((tq, D), jnp.float32)]           # un-normalized context
    cparams = pltpu.CompilerParams(
        dimension_semantics=("parallel", "parallel", "arbitrary"))

    if mask is None:
        kernel = functools.partial(_mha_kernel_nomask, num_heads=num_heads)
        in_specs = [q_spec, kv_spec, wo_spec, bo_spec]
        args = (q_proj, kv_proj, wo, bo)
    else:
        mask_f = mask.astype(jnp.float32)                  # (B, S, S); 1=keep, 0=block
        kernel = functools.partial(_mha_kernel_mask, num_heads=num_heads)
        mask_spec = pl.BlockSpec((1, tq, tk), lambda b, qi, ki: (b, qi, ki))
        in_specs = [q_spec, kv_spec, mask_spec, wo_spec, bo_spec]
        args = (q_proj, kv_proj, mask_f, wo, bo)

    out = pl.pallas_call(
        kernel,
        out_shape=jax.ShapeDtypeStruct((B, S, D), jnp.float32),
        grid=grid,
        in_specs=in_specs,
        out_specs=out_spec,
        scratch_shapes=scratch,
        compiler_params=cparams,
    )(*args)
    return out.astype(x.dtype)


# ---------------------------------------------------------------------------
# Params + plain-JAX reference
# ---------------------------------------------------------------------------
def init_params(key, D):
    k1, k2, k3, k4 = jax.random.split(key, 4)
    bound = 1.0 / math.sqrt(D)
    wqkv = jax.random.uniform(k1, (D, 3 * D), jnp.float32, -bound, bound)
    bqkv = jax.random.uniform(k2, (3 * D,), jnp.float32, -bound, bound)
    wo = jax.random.uniform(k3, (D, D), jnp.float32, -bound, bound)
    bo = jax.random.uniform(k4, (D,), jnp.float32, -bound, bound)
    return dict(wqkv=wqkv, bqkv=bqkv, wo=wo, bo=bo)


def _reference(x, params, mask, *, num_heads):
    B, S, D = x.shape
    dh = D // num_heads
    qkv = x @ params["wqkv"] + params["bqkv"]
    q, k, v = qkv[..., :D], qkv[..., D:2 * D], qkv[..., 2 * D:]

    def split(t):
        return t.reshape(B, S, num_heads, dh).transpose(0, 2, 1, 3)

    q, k, v = split(q), split(k), split(v)
    s = jnp.einsum('bhqd,bhkd->bhqk', q, k) / math.sqrt(dh)
    if mask is not None:
        s = jnp.where(mask[:, None, :, :] > 0, s, -1e9)
    p = jax.nn.softmax(s, axis=-1)
    ctx = jnp.einsum('bhqk,bhkd->bhqd', p, v).transpose(0, 2, 1, 3).reshape(B, S, D)
    return ctx @ params["wo"] + params["bo"]


if __name__ == "__main__":
    B, S, D, H = 2, 256, 128, 4
    root = jax.random.PRNGKey(0)
    kx, kp, km = jax.random.split(root, 3)
    x = jax.random.normal(kx, (B, S, D), dtype=jnp.float32)
    params = init_params(kp, D)

    # default forward: mask=None
    out = self_attention_forward(x, params, mask=None, num_heads=H)
    jax.block_until_ready(out)
    ref = _reference(x, params, None, num_heads=H)
    assert out.shape == (B, S, D)
    assert jnp.allclose(out, ref, atol=2e-3, rtol=2e-3)

    # masked forward (1 = attend, 0 = block)
    mask = (jax.random.uniform(km, (B, S, S)) > 0.2).astype(jnp.float32)
    out_m = self_attention_forward(x, params, mask=mask, num_heads=H)
    jax.block_until_ready(out_m)
    ref_m = _reference(x, params, mask, num_heads=H)
    assert jnp.allclose(out_m, ref_m, atol=2e-3, rtol=2e-3)

    # bf16 compute path (matmul inputs bf16, f32 accumulation) — looser bound
    out_bf = self_attention_forward(x, params, mask=None, num_heads=H,
                                    compute_dtype=jnp.bfloat16)
    jax.block_until_ready(out_bf)
    assert jnp.allclose(out_bf, ref, atol=6e-2, rtol=6e-2)

    print("KERNEL_OK")
</pallas_src>

<mosaic_0001>
module attributes {stable_mosaic.version = 11 : i64} {
  func.func @_qkv_kernel(%arg0: i32, %arg1: i32, %arg2: memref<1x128x128xf32, #tpu.memory_space<vmem>>, %arg3: memref<128x384xf32, #tpu.memory_space<vmem>>, %arg4: memref<1x384xf32, #tpu.memory_space<vmem>>, %arg5: memref<1x128x128xf32, #tpu.memory_space<vmem>>, %arg6: memref<1x128x256xf32, #tpu.memory_space<vmem>>) attributes {dimension_semantics = [#tpu.dimension_semantics<parallel>, #tpu.dimension_semantics<parallel>], iteration_bounds = array<i64: 2, 2>, scalar_prefetch = 0 : i64, scratch_operands = 0 : i64, tpu.core_type = #tpu.core_type<tc>, window_params = [{transform_indices = @transform_0, window_bounds = array<i64: 1, 128, 128>}, {pipeline_mode = #tpu.pipeline_mode<synchronous>, transform_indices = @transform_1, window_bounds = array<i64: 128, 384>}, {pipeline_mode = #tpu.pipeline_mode<synchronous>, transform_indices = @transform_2, window_bounds = array<i64: 1, 384>}, {transform_indices = @transform_3, window_bounds = array<i64: 1, 128, 128>}, {transform_indices = @transform_4, window_bounds = array<i64: 1, 128, 256>}]} {
    %c0 = arith.constant 0 : index
    %c0_0 = arith.constant 0 : index
    %c0_1 = arith.constant 0 : index
    %0 = vector.load %arg2[%c0, %c0_0, %c0_1] : memref<1x128x128xf32, #tpu.memory_space<vmem>>, vector<1x128x128xf32>
    %1 = vector.shape_cast %0 : vector<1x128x128xf32> to vector<128x128xf32>
    %c0_2 = arith.constant 0 : index
    %c0_3 = arith.constant 0 : index
    %2 = vector.load %arg3[%c0_2, %c0_3] : memref<128x384xf32, #tpu.memory_space<vmem>>, vector<128x384xf32>
    %cst = arith.constant dense<0.000000e+00> : vector<128x384xf32>
    %3 = tpu.matmul %1, %2, %cst {dimension_numbers = #tpu.dot_dimension_numbers<[1], [0], [0], [1], [0, 0, 1, 1], [], []>} : vector<128x128xf32>, vector<128x384xf32>, vector<128x384xf32> -> vector<128x384xf32>
    %c0_4 = arith.constant 0 : index
    %c0_5 = arith.constant 0 : index
    %4 = vector.load %arg4[%c0_4, %c0_5] : memref<1x384xf32, #tpu.memory_space<vmem>>, vector<1x384xf32>
    %5 = vector.broadcast %4 : vector<1x384xf32> to vector<128x384xf32>
    %6 = arith.addf %3, %5 : vector<128x384xf32>
    %7 = vector.extract_strided_slice %6 {offsets = [0, 0], sizes = [128, 128], strides = [1, 1]} : vector<128x384xf32> to vector<128x128xf32>
    %c0_6 = arith.constant 0 : index
    %c0_7 = arith.constant 0 : index
    %c0_8 = arith.constant 0 : index
    %8 = vector.load %arg5[%c0_6, %c0_7, %c0_8] : memref<1x128x128xf32, #tpu.memory_space<vmem>>, vector<1x128x128xf32>
    %9 = vector.shape_cast %8 : vector<1x128x128xf32> to vector<128x128xf32>
    %10 = vector.shape_cast %7 : vector<128x128xf32> to vector<1x128x128xf32>
    tpu.vector_store %arg5[%c0_6, %c0_7, %c0_8], %10 {strides = array<i32>} : memref<1x128x128xf32, #tpu.memory_space<vmem>>, vector<1x128x128xf32>,
    %11 = vector.extract_strided_slice %6 {offsets = [0, 128], sizes = [128, 256], strides = [1, 1]} : vector<128x384xf32> to vector<128x256xf32>
    %c0_9 = arith.constant 0 : index
    %c0_10 = arith.constant 0 : index
    %c0_11 = arith.constant 0 : index
    %12 = vector.load %arg6[%c0_9, %c0_10, %c0_11] : memref<1x128x256xf32, #tpu.memory_space<vmem>>, vector<1x128x256xf32>
    %13 = vector.shape_cast %12 : vector<1x128x256xf32> to vector<128x256xf32>
    %14 = vector.shape_cast %11 : vector<128x256xf32> to vector<1x128x256xf32>
    tpu.vector_store %arg6[%c0_9, %c0_10, %c0_11], %14 {strides = array<i32>} : memref<1x128x256xf32, #tpu.memory_space<vmem>>, vector<1x128x256xf32>,
    return
  }
  func.func @transform_0(%arg0: i32, %arg1: i32) -> (i32, i32, i32) {
    %c0_i32 = arith.constant 0 : i32
    %c0_i32_0 = arith.constant 0 : i32
    return %arg0, %arg1, %c0_i32 : i32, i32, i32
  }
  func.func @transform_1(%arg0: i32, %arg1: i32) -> (i32, i32) {
    %c0_i32 = arith.constant 0 : i32
    %c0_i32_0 = arith.constant 0 : i32
    %c0_i32_1 = arith.constant 0 : i32
    return %c0_i32, %c0_i32_0 : i32, i32
  }
  func.func @transform_2(%arg0: i32, %arg1: i32) -> (i32, i32) {
    %c0_i32 = arith.constant 0 : i32
    %c0_i32_0 = arith.constant 0 : i32
    %c0_i32_1 = arith.constant 0 : i32
    return %c0_i32, %c0_i32_0 : i32, i32
  }
  func.func @transform_3(%arg0: i32, %arg1: i32) -> (i32, i32, i32) {
    %c0_i32 = arith.constant 0 : i32
    %c0_i32_0 = arith.constant 0 : i32
    return %arg0, %arg1, %c0_i32 : i32, i32, i32
  }
  func.func @transform_4(%arg0: i32, %arg1: i32) -> (i32, i32, i32) {
    %c0_i32 = arith.constant 0 : i32
    %c0_i32_0 = arith.constant 0 : i32
    return %arg0, %arg1, %c0_i32 : i32, i32, i32
  }
}

</mosaic_0001>

<llo_original>
// kernel: tpu_custom_call.1
$region0: #{tpu_custom_call.1}
  #allocation0 [shape = 'u32[]', space=smem, size = 0x4, offset = 0x4, fixed_abs, tag = 'smem constant byte address 0x4 - core index']
  #allocation1 [shape = 'u32[144,128]{1,0:T(1,128)}', space=vmem, size = 0x12000, scoped, tag = 'internal scratch']
  %s0 = inlined_call_operand.hbm [shape: f32[2,256,128], index: 0, kind: input, shape index: {}]
  %s1 = inlined_call_operand.hbm [shape: f32[128,384], index: 1, kind: input, shape index: {}]
  %s2 = inlined_call_operand.vmem [shape: f32[1,384], index: 2, kind: input, shape index: {}]
  %s3 = inlined_call_operand.hbm [shape: f32[2,256,128], index: 3, kind: output, shape index: {0}]
  %s4 = inlined_call_operand.hbm [shape: f32[2,256,256], index: 4, kind: output, shape index: {1}]
  %5 = xla_tuple %s3, %s4
  %s6 = sld [smem:[#allocation0]]
  $region61: #{tpu_custom_call.1} parent=0
    _
  %s8 = ssub.s32 1, %s6
  %s9 = scalar_select 0, %s8, %s6
  $region1: #{tpu_custom_call.1} parent=0
    #allocation2 [shape = 'u8[131072]{0}', space=vmem, size = 0x20000, scoped, tag = 'input window, operand 0']
    #allocation3 [shape = 's32[2]{0}', space=sflag, size = 0x8, scoped, tag = 'scoped memory for tpu_custom_call.1']
    #allocation4 [shape = 's32[2]{0}', space=sflag, size = 0x8, scoped, tag = 'scoped memory for tpu_custom_call.1']
    #allocation5 [shape = 'u8[196608]{0}', space=vmem, size = 0x30000, scoped, tag = 'input window, operand 1, single buffered']
    #allocation6 [shape = 's32[1]{0}', space=sflag, size = 0x4, scoped, tag = 'scoped memory for tpu_custom_call.1']
    #allocation7 [shape = 'u8[131072]{0}', space=vmem, size = 0x20000, scoped, tag = 'output window, operand 0']
    #allocation8 [shape = 'u8[262144]{0}', space=vmem, size = 0x40000, scoped, tag = 'output window, operand 1']
    #allocation9 [shape = 's32[2]{0}', space=sflag, size = 0x8, scoped, tag = 'scoped memory for tpu_custom_call.1']
    %10 = vsyncpa [#allocation3], 0
    %s11 = scalar_lea.sflag [#allocation3], 1
    %12 = vsyncpa %s11, 0
    %13 = vsyncpa [#allocation6], 0
    %14 = vsyncpa [#allocation4], 0
    %s15 = scalar_lea.sflag [#allocation4], 1
    %16 = vsyncpa %s15, 0
    %17 = vsyncpa [#allocation9], 0
    %s18 = scalar_lea.sflag [#allocation9], 1
    %19 = vsyncpa %s18, 0
    loop: start=0, step=1, limit=6
    $region2: #{tpu_custom_call.1} parent=1 // loop_pre_header
      _
    $region3: #{tpu_custom_call.1} parent=1 // loop_header
      %s21 = sphi 0, %s25
      %p22 = scmp.ge.s32.totalorder %s21, 6
      %s28 = sphi 0, %s40
      %s29 = sphi 0, %s36
      %s30 = sphi 0, %s28
      %s31 = sphi 0, %s29
      %s32 = sphi 0, %s30
      %s33 = sphi 0, %s31
      %s45 = sphi 0, %s47
      %s48 = sphi 0, %s45
      %s49 = sphi 0, %s48
      %s65 = sphi 0, %s49
      %s69 = sphi 0, %s69
      %s71 = sphi 0, %s69
      %s72 = sphi 0, %s71
      %s86 = sphi 0, %s72
      %s90 = sphi 0, %s90
      %s92 = sphi 0, %s90
      %s93 = sphi 0, %s92
      %s107 = sphi 0, %s93
      %s115 = sphi 0, %s117
      %s118 = sphi 0, %s115
      %s119 = sphi 0, %s118
      %s135 = sphi 0, %s119
      %s143 = sphi 0, %s145
      %s146 = sphi 0, %s143
      %s147 = sphi 0, %s146
      %s163 = sphi 0, %s147
    $region4: #{tpu_custom_call.1} parent=1 // loop_header_branch
      %24 = sbr.rel (%p22) target = $region8
    $region5: #{tpu_custom_call.1} parent=1 // loop_body
      %s26 = ssub.s32 %s21, 1
      %s27 = ssub.s32 %s21, 2
      %s34 = sadd.s32 1, %s29
      %p35 = scmp.ge.s32.totalorder %s34, 2
      %s36 = scalar_select %p35, 0, %s34
      %s37 = sadd.s32 1, %s28
      %s38 = scalar_select %p35, %s37, %s28
      %p39 = scmp.ge.s32.totalorder %s38, 2
      %s40 = scalar_select %p39, 0, %s38
      %s41 = ssub.s32 %s28, %s40
      %s42 = ssub.s32 %s29, %s36
      %s43 = sor.u32 %s41, %s42
      %p44 = scmp.eq.s32.totalorder %s43, 0
      %s46 = sadd.s32 %s45, 1
      %s47 = scalar_select %p44, %s45, %s46
      %p50 = pneg %p44
      %p51 = scmp.eq.s32.totalorder %s21, 3
      %p52 = por %p50, %p51
      %p53 = scmp.ne.s32.totalorder %s45, %s48
      %p54 = scmp.eq.s32.totalorder %s21, 0
      %p55 = por %p53, %p54
      %p56 = scmp.ne.s32.totalorder %s45, %s48
      %p57 = scmp.eq.s32.totalorder %s26, 3
      %p58 = por %p56, %p57
      %p59 = scmp.ne.s32.totalorder %s48, %s49
      %p60 = scmp.eq.s32.totalorder %s26, 0
      %p61 = por %p59, %p60
      %p62 = scmp.ne.s32.totalorder %s48, %s49
      %p63 = scmp.eq.s32.totalorder %s27, 3
      %p64 = por %p62, %p63
      %p66 = scmp.ne.s32.totalorder %s49, %s65
      %p67 = scmp.eq.s32.totalorder %s27, 0
      %p68 = por %p66, %p67
      %s70 = sadd.s32 %s69, 1
      %p73 = scmp.eq.s32.totalorder %s21, 3
      %p74 = scmp.ne.s32.totalorder %s69, %s71
      %p75 = scmp.eq.s32.totalorder %s21, 0
      %p76 = por %p74, %p75
      %p77 = scmp.ne.s32.totalorder %s69, %s71
      %p78 = scmp.eq.s32.totalorder %s26, 3
      %p79 = por %p77, %p78
      %p80 = scmp.ne.s32.totalorder %s71, %s72
      %p81 = scmp.eq.s32.totalorder %s26, 0
      %p82 = por %p80, %p81
      %p83 = scmp.ne.s32.totalorder %s71, %s72
      %p84 = scmp.eq.s32.totalorder %s27, 3
      %p85 = por %p83, %p84
      %p87 = scmp.ne.s32.totalorder %s72, %s86
      %p88 = scmp.eq.s32.totalorder %s27, 0
      %p89 = por %p87, %p88
      %s91 = sadd.s32 %s90, 1
      %p94 = scmp.eq.s32.totalorder %s21, 3
      %p95 = scmp.ne.s32.totalorder %s90, %s92
      %p96 = scmp.eq.s32.totalorder %s21, 0
      %p97 = por %p95, %p96
      %p98 = scmp.ne.s32.totalorder %s90, %s92
      %p99 = scmp.eq.s32.totalorder %s26, 3
      %p100 = por %p98, %p99
      %p101 = scmp.ne.s32.totalorder %s92, %s93
      %p102 = scmp.eq.s32.totalorder %s26, 0
      %p103 = por %p101, %p102
      %p104 = scmp.ne.s32.totalorder %s92, %s93
      %p105 = scmp.eq.s32.totalorder %s27, 3
      %p106 = por %p104, %p105
      %p108 = scmp.ne.s32.totalorder %s93, %s107
      %p109 = scmp.eq.s32.totalorder %s27, 0
      %p110 = por %p108, %p109
      %s111 = ssub.s32 %s28, %s40
      %s112 = ssub.s32 %s29, %s36
      %s113 = sor.u32 %s111, %s112
      %p114 = scmp.eq.s32.totalorder %s113, 0
      %s116 = sadd.s32 %s115, 1
      %s117 = scalar_select %p114, %s115, %s116
      %p120 = pneg %p114
      %p121 = scmp.eq.s32.totalorder %s21, 3
      %p122 = por %p120, %p121
      %p123 = scmp.ne.s32.totalorder %s115, %s118
      %p124 = scmp.eq.s32.totalorder %s21, 0
      %p125 = por %p123, %p124
      %p126 = scmp.ne.s32.totalorder %s115, %s118
      %p127 = scmp.eq.s32.totalorder %s26, 3
      %p128 = por %p126, %p127
      %p129 = scmp.ne.s32.totalorder %s118, %s119
      %p130 = scmp.eq.s32.totalorder %s26, 0
      %p131 = por %p129, %p130
      %p132 = scmp.ne.s32.totalorder %s118, %s119
      %p133 = scmp.eq.s32.totalorder %s27, 3
      %p134 = por %p132, %p133
      %p136 = scmp.ne.s32.totalorder %s119, %s135
      %p137 = scmp.eq.s32.totalorder %s27, 0
      %p138 = por %p136, %p137
      %s139 = ssub.s32 %s28, %s40
      %s140 = ssub.s32 %s29, %s36
      %s141 = sor.u32 %s139, %s140
      %p142 = scmp.eq.s32.totalorder %s141, 0
      %s144 = sadd.s32 %s143, 1
      %s145 = scalar_select %p142, %s143, %s144
      %p148 = pneg %p142
      %p149 = scmp.eq.s32.totalorder %s21, 3
      %p150 = por %p148, %p149
      %p151 = scmp.ne.s32.totalorder %s143, %s146
      %p152 = scmp.eq.s32.totalorder %s21, 0
      %p153 = por %p151, %p152
      %p154 = scmp.ne.s32.totalorder %s143, %s146
      %p155 = scmp.eq.s32.totalorder %s26, 3
      %p156 = por %p154, %p155
      %p157 = scmp.ne.s32.totalorder %s146, %s147
      %p158 = scmp.eq.s32.totalorder %s26, 0
      %p159 = por %p157, %p158
      %p160 = scmp.ne.s32.totalorder %s146, %s147
      %p161 = scmp.eq.s32.totalorder %s27, 3
      %p162 = por %p160, %p161
      %p164 = scmp.ne.s32.totalorder %s147, %s163
      %p165 = scmp.eq.s32.totalorder %s27, 0
      %p166 = por %p164, %p165
      %p167 = scmp.le.s32.totalorder 1, %s21
      %p168 = scmp.lt.s32.totalorder %s21, 5
      %p169 = pnand %p167, %p168
      %p170 = pneg %p169
      // Predicated region
      $region9: #{tpu_custom_call.1} parent=5 // pred_check
        _
      $region10: #{tpu_custom_call.1} parent=5 // pred_check_branch
        %172 = sbr.rel (%p169) target = $region12
      $region11: #{tpu_custom_call.1} parent=5 // pred_region
        %s173 = ssub.s32 %s21, 1
        // Predicated region
        $region13: #{tpu_custom_call.1} parent=11 // pred_check
          %p174 = pneg %p82
        $region14: #{tpu_custom_call.1} parent=11 // pred_check_branch
          %176 = sbr.rel (%p174) target = $region16
        $region15: #{tpu_custom_call.1} parent=11 // pred_region
          %s178 = ssub.s32 6144, 6144
          %179 = vsyncadd [#allocation6], %s178
          %s180 = sshll.u32 [#allocation5], 4
          %s181 = int_to_ptr.vmem [resolvable:$true] %s180
          %186 = dma.hbm_to_vmem [thread:$0]  %s1, 6144, %s181, [#allocation6], 384, 384, 24
        $region16: #{tpu_custom_call.1} parent=11 // pred_fallthru
          _
        // Predicated region
        $region17: #{tpu_custom_call.1} parent=11 // pred_check
          %p187 = pneg %p103
        $region18: #{tpu_custom_call.1} parent=11 // pred_check_branch
          %189 = sbr.rel (%p187) target = $region20
        $region19: #{tpu_custom_call.1} parent=11 // pred_region
          _
        $region20: #{tpu_custom_call.1} parent=11 // pred_fallthru
          _
      $region12: #{tpu_custom_call.1} parent=5 // pred_fallthru
        _
      %p190 = scmp.lt.s32.totalorder %s21, 4
      // Predicated region
      $region21: #{tpu_custom_call.1} parent=5 // pred_check
        %p191 = pneg %p190
      $region22: #{tpu_custom_call.1} parent=5 // pred_check_branch
        %193 = sbr.rel (%p191) target = $region24
      $region23: #{tpu_custom_call.1} parent=5 // pred_region
        // Predicated region
        $region25: #{tpu_custom_call.1} parent=23 // pred_check
          %p194 = pneg %p55
        $region26: #{tpu_custom_call.1} parent=23 // pred_check_branch
          %196 = sbr.rel (%p194) target = $region28
        $region27: #{tpu_custom_call.1} parent=23 // pred_region
          %s197 = sand.u32 %s45, 1
          %s198 = scalar_lea.sflag [#allocation3], %s197
          %s199 = sand.u32 %s45, 1
          %s200 = smul.addr %s199, 128
          %s201 = scalar_lea.vmem [#allocation2], %s200
          %s202 = smul.u32 16, %s29
          %s204 = ssub.s32 2048, 2048
          %205 = vsyncadd %s198, %s204
          %s206 = smul.addr %s28, 32
          %s207 = sadd.s32 %s202, %s206
          %s208 = smul.addr %s207, 128
          %s209 = scalar_lea.hbm %s0, %s208
          %s210 = sshll.u32 %s201, 4
          %s211 = int_to_ptr.vmem [resolvable:$true] %s210
          %216 = dma.hbm_to_vmem [thread:$0]  %s209, 2048, %s211, %s198, 128, 128, 8
        $region28: #{tpu_custom_call.1} parent=23 // pred_fallthru
          _
      $region24: #{tpu_custom_call.1} parent=5 // pred_fallthru
        _
      %p217 = scmp.le.s32.totalorder 1, %s21
      %p218 = scmp.lt.s32.totalorder %s21, 5
      %p219 = pnand %p217, %p218
      %p220 = pneg %p219
      // Predicated region
      $region29: #{tpu_custom_call.1} parent=5 // pred_check
        _
      $region30: #{tpu_custom_call.1} parent=5 // pred_check_branch
        %222 = sbr.rel (%p219) target = $region32
      $region31: #{tpu_custom_call.1} parent=5 // pred_region
        %s223 = ssub.s32 %s21, 1
        %s224 = sand.u32 %s48, 1
        %s225 = scalar_lea.sflag [#allocation3], %s224
        %s226 = sand.u32 %s48, 1
        %s227 = smul.addr %s226, 128
        %s228 = scalar_lea.vmem [#allocation2], %s227
        // Predicated region
        $region33: #{tpu_custom_call.1} parent=31 // pred_check
          %p229 = pneg %p61
        $region34: #{tpu_custom_call.1} parent=31 // pred_check_branch
          %231 = sbr.rel (%p229) target = $region36
        $region35: #{tpu_custom_call.1} parent=31 // pred_region
          %232 = dma.done %s225, 2048
        $region36: #{tpu_custom_call.1} parent=31 // pred_fallthru
          _
        // Predicated region
        $region37: #{tpu_custom_call.1} parent=31 // pred_check
          %p233 = pneg %p82
        $region38: #{tpu_custom_call.1} parent=31 // pred_check_branch
          %235 = sbr.rel (%p233) target = $region40
        $region39: #{tpu_custom_call.1} parent=31 // pred_region
          %236 = dma.done [#allocation6], 6144
        $region40: #{tpu_custom_call.1} parent=31 // pred_fallthru
          _
        %s237 = sand.u32 %s48, 1
        %s238 = scalar_lea.sflag [#allocation3], %s237
        %s239 = sand.u32 %s48, 1
        %s240 = smul.addr %s239, 128
        %s241 = scalar_lea.vmem [#allocation2], %s240
        %p242 = pneg %p61
        %p243 = pneg %p58
        %p244 = pneg %p82
        %p245 = pneg %p79
        %p246 = pneg %p103
        %p247 = pneg %p100
        %p248 = pneg %p131
        %p249 = pneg %p128
        %s250 = sand.u32 %s118, 1
        %s251 = scalar_lea.sflag [#allocation4], %s250
        %s252 = sand.u32 %s118, 1
        %s253 = smul.addr %s252, 128
        %s254 = scalar_lea.vmem [#allocation7], %s253
        %p255 = pneg %p159
        %p256 = pneg %p156
        %s257 = sand.u32 %s146, 1
        %s258 = scalar_lea.sflag [#allocation9], %s257
        %s259 = sand.u32 %s146, 1
        %s260 = smul.addr %s259, 256
        %s261 = scalar_lea.vmem [#allocation8], %s260
        %s262 = smul.u32 16, %s31
        %s263 = smul.u32 16, %s31
        %s264 = smul.u32 16, %s31
        %v265 = vld [vmem:[%s228] sm:$0xff]
        %v266 = vld [vmem:[%s228 + $0x8] sm:$0xff]
        %v267 = vld [vmem:[%s228 + $0x10] sm:$0xff]
        %v268 = vld [vmem:[%s228 + $0x18] sm:$0xff]
        %v269 = vld [vmem:[%s228 + $0x20] sm:$0xff]
        %v270 = vld [vmem:[%s228 + $0x28] sm:$0xff]
        %v271 = vld [vmem:[%s228 + $0x30] sm:$0xff]
        %v272 = vld [vmem:[%s228 + $0x38] sm:$0xff]
        %v273 = vld [vmem:[%s228 + $0x40] sm:$0xff]
        %v274 = vld [vmem:[%s228 + $0x48] sm:$0xff]
        %v275 = vld [vmem:[%s228 + $0x50] sm:$0xff]
        %v276 = vld [vmem:[%s228 + $0x58] sm:$0xff]
        %v277 = vld [vmem:[%s228 + $0x60] sm:$0xff]
        %v278 = vld [vmem:[%s228 + $0x68] sm:$0xff]
        %v279 = vld [vmem:[%s228 + $0x70] sm:$0xff]
        %v280 = vld [vmem:[%s228 + $0x78] sm:$0xff]
        %v281 = vld [vmem:[#allocation5] sm:$0xff]
        %v282 = vld [vmem:[#allocation5 + $0x8] sm:$0xff]
        %v283 = vld [vmem:[#allocation5 + $0x10] sm:$0xff]
        %v284 = vld [vmem:[#allocation5 + $0x18] sm:$0xff]
        %v285 = vld [vmem:[#allocation5 + $0x20] sm:$0xff]
        %v286 = vld [vmem:[#allocation5 + $0x28] sm:$0xff]
        %v287 = vld [vmem:[#allocation5 + $0x30] sm:$0xff]
        %v288 = vld [vmem:[#allocation5 + $0x38] sm:$0xff]
        %v289 = vld [vmem:[#allocation5 + $0x40] sm:$0xff]
        %v290 = vld [vmem:[#allocation5 + $0x48] sm:$0xff]
        %v291 = vld [vmem:[#allocation5 + $0x50] sm:$0xff]
        %v292 = vld [vmem:[#allocation5 + $0x58] sm:$0xff]
        %v293 = vld [vmem:[#allocation5 + $0x60] sm:$0xff]
        %v294 = vld [vmem:[#allocation5 + $0x68] sm:$0xff]
        %v295 = vld [vmem:[#allocation5 + $0x70] sm:$0xff]
        %v296 = vld [vmem:[#allocation5 + $0x78] sm:$0xff]
        %v297 = vld [vmem:[#allocation5 + $0x80] sm:$0xff]
        %v298 = vld [vmem:[#allocation5 + $0x88] sm:$0xff]
        %v299 = vld [vmem:[#allocation5 + $0x90] sm:$0xff]
        %v300 = vld [vmem:[#allocation5 + $0x98] sm:$0xff]
        %v301 = vld [vmem:[#allocation5 + $0xa0] sm:$0xff]
        %v302 = vld [vmem:[#allocation5 + $0xa8] sm:$0xff]
        %v303 = vld [vmem:[#allocation5 + $0xb0] sm:$0xff]
        %v304 = vld [vmem:[#allocation5 + $0xb8] sm:$0xff]
        %v305 = vld [vmem:[#allocation5 + $0xc0] sm:$0xff]
        %v306 = vld [vmem:[#allocation5 + $0xc8] sm:$0xff]
        %v307 = vld [vmem:[#allocation5 + $0xd0] sm:$0xff]
        %v308 = vld [vmem:[#allocation5 + $0xd8] sm:$0xff]
        %v309 = vld [vmem:[#allocation5 + $0xe0] sm:$0xff]
        %v310 = vld [vmem:[#allocation5 + $0xe8] sm:$0xff]
        %v311 = vld [vmem:[#allocation5 + $0xf0] sm:$0xff]
        %v312 = vld [vmem:[#allocation5 + $0xf8] sm:$0xff]
        %v313 = vld [vmem:[#allocation5 + $0x100] sm:$0xff]
        %v314 = vld [vmem:[#allocation5 + $0x108] sm:$0xff]
        %v315 = vld [vmem:[#allocation5 + $0x110] sm:$0xff]
        %v316 = vld [vmem:[#allocation5 + $0x118] sm:$0xff]
        %v317 = vld [vmem:[#allocation5 + $0x120] sm:$0xff]
        %v318 = vld [vmem:[#allocation5 + $0x128] sm:$0xff]
        %v319 = vld [vmem:[#allocation5 + $0x130] sm:$0xff]
        %v320 = vld [vmem:[#allocation5 + $0x138] sm:$0xff]
        %v321 = vld [vmem:[#allocation5 + $0x140] sm:$0xff]
        %v322 = vld [vmem:[#allocation5 + $0x148] sm:$0xff]
        %v323 = vld [vmem:[#allocation5 + $0x150] sm:$0xff]
        %v324 = vld [vmem:[#allocation5 + $0x158] sm:$0xff]
        %v325 = vld [vmem:[#allocation5 + $0x160] sm:$0xff]
        %v326 = vld [vmem:[#allocation5 + $0x168] sm:$0xff]
        %v327 = vld [vmem:[#allocation5 + $0x170] sm:$0xff]
        %v328 = vld [vmem:[#allocation5 + $0x178] sm:$0xff]
        %v329 = vld [vmem:[%s2] sm:$0x7]
        %v331 = vlaneseq
        %v332 = vshrl.u32 %v331, 7
        %v333 = vsub.s32 0, %v332
        %v334 = vrot.slane %v329, %v333
        %v335 = vlaneseq
        %v336 = vshrl.u32 %v335, 7
        %v337 = vsub.s32 1, %v336
        %v338 = vrot.slane %v329, %v337
        %v339 = vlaneseq
        %v340 = vshrl.u32 %v339, 7
        %v341 = vsub.s32 2, %v340
        %v342 = vrot.slane %v329, %v341
        %346 = vmatprep.subr.mxu0 %v282
        %347 = vmatpush1.msra.mxu0 %v281
        %348 = vmatprep.subr.mxu0 %v285
        %349 = vmatpush1.msra.mxu0 %v284
        %350 = vmatprep.subr.mxu0 %v288
        %351 = vmatpush1.msra.mxu0 %v287
        %352 = vmatprep.subr.mxu0 %v291
        %353 = vmatpush1.msra.mxu0 %v290
        %354 = vmatprep.subr.mxu0 %v294
        %355 = vmatpush1.msra.mxu0 %v293
        %356 = vmatprep.subr.mxu0 %v297
        %357 = vmatpush1.msra.mxu0 %v296
        %358 = vmatprep.subr.mxu0 %v300
        %359 = vmatpush1.msra.mxu0 %v299
        %360 = vmatprep.subr.mxu0 %v303
        %361 = vmatpush1.msra.mxu0 %v302
        %362 = vmatprep.subr.mxu0 %v306
        %363 = vmatpush1.msra.mxu0 %v305
        %364 = vmatprep.subr.mxu0 %v309
        %365 = vmatpush1.msra.mxu0 %v308
        %366 = vmatprep.subr.mxu0 %v312
        %367 = vmatpush1.msra.mxu0 %v311
        %368 = vmatprep.subr.mxu0 %v315
        %369 = vmatpush1.msra.mxu0 %v314
        %370 = vmatprep.subr.mxu0 %v318
        %371 = vmatpush1.msra.mxu0 %v317
        %372 = vmatprep.subr.mxu0 %v321
        %373 = vmatpush1.msra.mxu0 %v320
        %374 = vmatprep.subr.mxu0 %v324
        %375 = vmatpush1.msra.mxu0 %v323
        %376 = vmatprep.subr.mxu0 %v327
        %377 = vmatpush1.msra.mxu0 %v326
        %378 = vmatprep.subr.mxu0 0.0
        %379 = vmatpush1.msra.mxu0 0.0
        %380 = vmatprep.subr.mxu0 0.0
        %381 = vmatpush1.msra.mxu0 0.0
        %382 = vmatprep.subr.mxu0 0.0
        %383 = vmatpush1.msra.mxu0 0.0
        %384 = vmatprep.subr.mxu0 0.0
        %385 = vmatpush1.msra.mxu0 0.0
        %386 = vmatprep.subr.mxu0 0.0
        %387 = vmatpush1.msra.mxu0 0.0
        %388 = vmatprep.subr.mxu0 0.0
        %389 = vmatpush1.msra.mxu0 0.0
        %390 = vmatprep.subr.mxu0 0.0
        %391 = vmatpush1.msra.mxu0 0.0
        %392 = vmatprep.subr.mxu0 0.0
        %393 = vmatpush1.msra.mxu0 0.0
        %394 = vmatprep.subr.mxu0 0.0
        %395 = vmatpush1.msra.mxu0 0.0
        %396 = vmatprep.subr.mxu0 0.0
        %397 = vmatpush1.msra.mxu0 0.0
        %398 = vmatprep.subr.mxu0 0.0
        %399 = vmatpush1.msra.mxu0 0.0
        %400 = vmatprep.subr.mxu0 0.0
        %401 = vmatpush1.msra.mxu0 0.0
        %402 = vmatprep.subr.mxu0 0.0
        %403 = vmatpush1.msra.mxu0 0.0
        %404 = vmatprep.subr.mxu0 0.0
        %405 = vmatpush1.msra.mxu0 0.0
        %406 = vmatprep.subr.mxu0 0.0
        %407 = vmatpush1.msra.mxu0 0.0
        %408 = vmatprep.subr.mxu0 0.0
        %409 = vmatpush1.msra.mxu0 0.0
        %410 = vmatprep.mubr.f32.mxu0 0.0
        %411 = vmatmul.mubr.f32.gmra.mrb[0].mxu0 %v265
        %v412 = vpop.f32.mrb[0].mxu0
        %v413 = vadd.f32 %v334, %v412
        %v414 = vpop.f32.mrb[0].mxu0
        %v415 = vadd.f32 %v338, %v414
        %416 = vmatprep.mubr.f32.mxu0 0.0
        %417 = vmatmul.mubr.f32.gmra.mrb[0].mxu0 %v266
        %v418 = vpop.f32.mrb[0].mxu0
        %v419 = vadd.f32 %v334, %v418
        %v420 = vpop.f32.mrb[0].mxu0
        %v421 = vadd.f32 %v338, %v420
        %422 = vmatprep.mubr.f32.mxu0 0.0
        %423 = vmatmul.mubr.f32.gmra.mrb[0].mxu0 %v267
        %v424 = vpop.f32.mrb[0].mxu0
        %v425 = vadd.f32 %v334, %v424
        %v426 = vpop.f32.mrb[0].mxu0
        %v427 = vadd.f32 %v338, %v426
        %428 = vmatprep.mubr.f32.mxu0 0.0
        %429 = vmatmul.mubr.f32.gmra.mrb[0].mxu0 %v268
        %v430 = vpop.f32.mrb[0].mxu0
        %v431 = vadd.f32 %v334, %v430
        %v432 = vpop.f32.mrb[0].mxu0
        %v433 = vadd.f32 %v338, %v432
        %434 = vmatprep.mubr.f32.mxu0 0.0
        %435 = vmatmul.mubr.f32.gmra.mrb[0].mxu0 %v269
        %v436 = vpop.f32.mrb[0].mxu0
        %v437 = vadd.f32 %v334, %v436
        %v438 = vpop.f32.mrb[0].mxu0
        %v439 = vadd.f32 %v338, %v438
        %440 = vmatprep.mubr.f32.mxu0 0.0
        %441 = vmatmul.mubr.f32.gmra.mrb[0].mxu0 %v270
        %v442 = vpop.f32.mrb[0].mxu0
        %v443 = vadd.f32 %v334, %v442
        %v444 = vpop.f32.mrb[0].mxu0
        %v445 = vadd.f32 %v338, %v444
        %446 = vmatprep.mubr.f32.mxu0 0.0
        %447 = vmatmul.mubr.f32.gmra.mrb[0].mxu0 %v271
        %v448 = vpop.f32.mrb[0].mxu0
        %v449 = vadd.f32 %v334, %v448
        %v450 = vpop.f32.mrb[0].mxu0
        %v451 = vadd.f32 %v338, %v450
        %452 = vmatprep.mubr.f32.mxu0 0.0
        %453 = vmatmul.mubr.f32.gmra.mrb[0].mxu0 %v272
        %v454 = vpop.f32.mrb[0].mxu0
        %v455 = vadd.f32 %v334, %v454
        %v456 = vpop.f32.mrb[0].mxu0
        %v457 = vadd.f32 %v338, %v456
        %458 = vmatprep.mubr.f32.mxu0 0.0
        %459 = vmatmul.mubr.f32.gmra.mrb[0].mxu0 %v273
        %v460 = vpop.f32.mrb[0].mxu0
        %v461 = vadd.f32 %v334, %v460
        %v462 = vpop.f32.mrb[0].mxu0
        %v463 = vadd.f32 %v338, %v462
        %464 = vmatprep.mubr.f32.mxu0 0.0
        %465 = vmatmul.mubr.f32.gmra.mrb[0].mxu0 %v274
        %v466 = vpop.f32.mrb[0].mxu0
        %v467 = vadd.f32 %v334, %v466
        %v468 = vpop.f32.mrb[0].mxu0
        %v469 = vadd.f32 %v338, %v468
        %470 = vmatprep.mubr.f32.mxu0 0.0
        %471 = vmatmul.mubr.f32.gmra.mrb[0].mxu0 %v275
        %v472 = vpop.f32.mrb[0].mxu0
        %v473 = vadd.f32 %v334, %v472
        %v474 = vpop.f32.mrb[0].mxu0
        %v475 = vadd.f32 %v338, %v474
        %476 = vmatprep.mubr.f32.mxu0 0.0
        %477 = vmatmul.mubr.f32.gmra.mrb[0].mxu0 %v276
        %v478 = vpop.f32.mrb[0].mxu0
        %v479 = vadd.f32 %v334, %v478
        %v480 = vpop.f32.mrb[0].mxu0
        %v481 = vadd.f32 %v338, %v480
        %482 = vmatprep.mubr.f32.mxu0 0.0
        %483 = vmatmul.mubr.f32.gmra.mrb[0].mxu0 %v277
        %v484 = vpop.f32.mrb[0].mxu0
        %v485 = vadd.f32 %v334, %v484
        %v486 = vpop.f32.mrb[0].mxu0
        %v487 = vadd.f32 %v338, %v486
        %488 = vmatprep.mubr.f32.mxu0 0.0
        %489 = vmatmul.mubr.f32.gmra.mrb[0].mxu0 %v278
        %v490 = vpop.f32.mrb[0].mxu0
        %v491 = vadd.f32 %v334, %v490
        %v492 = vpop.f32.mrb[0].mxu0
        %v493 = vadd.f32 %v338, %v492
        %494 = vmatprep.mubr.f32.mxu0 0.0
        %495 = vmatmul.mubr.f32.gmra.mrb[0].mxu0 %v279
        %v496 = vpop.f32.mrb[0].mxu0
        %v497 = vadd.f32 %v334, %v496
        %v498 = vpop.f32.mrb[0].mxu0
        %v499 = vadd.f32 %v338, %v498
        %500 = vmatprep.mubr.f32.mxu0 0.0
        %501 = vmatmul.mubr.f32.gmra.mrb[0].mxu0 %v280
        %v502 = vpop.f32.mrb[0].mxu0
        %v503 = vadd.f32 %v334, %v502
        %v504 = vpop.f32.mrb[0].mxu0
        %v505 = vadd.f32 %v338, %v504
        %506 = vdwg.mxu0
        %507 = vmatprep.subr.mxu0 0.0
        %508 = vmatpush1.msra.mxu0 %v283
        %509 = vmatprep.subr.mxu0 0.0
        %510 = vmatpush1.msra.mxu0 %v286
        %511 = vmatprep.subr.mxu0 0.0
        %512 = vmatpush1.msra.mxu0 %v289
        %513 = vmatprep.subr.mxu0 0.0
        %514 = vmatpush1.msra.mxu0 %v292
        %515 = vmatprep.subr.mxu0 0.0
        %516 = vmatpush1.msra.mxu0 %v295
        %517 = vmatprep.subr.mxu0 0.0
        %518 = vmatpush1.msra.mxu0 %v298
        %519 = vmatprep.subr.mxu0 0.0
        %520 = vmatpush1.msra.mxu0 %v301
        %521 = vmatprep.subr.mxu0 0.0
        %522 = vmatpush1.msra.mxu0 %v304
        %523 = vmatprep.subr.mxu0 0.0
        %524 = vmatpush1.msra.mxu0 %v307
        %525 = vmatprep.subr.mxu0 0.0
        %526 = vmatpush1.msra.mxu0 %v310
        %527 = vmatprep.subr.mxu0 0.0
        %528 = vmatpush1.msra.mxu0 %v313
        %529 = vmatprep.subr.mxu0 0.0
        %530 = vmatpush1.msra.mxu0 %v316
        %531 = vmatprep.subr.mxu0 0.0
        %532 = vmatpush1.msra.mxu0 %v319
        %533 = vmatprep.subr.mxu0 0.0
        %534 = vmatpush1.msra.mxu0 %v322
        %535 = vmatprep.subr.mxu0 0.0
        %536 = vmatpush1.msra.mxu0 %v325
        %537 = vmatprep.subr.mxu0 0.0
        %538 = vmatpush1.msra.mxu0 %v328
        %539 = vmatprep.subr.mxu0 0.0
        %540 = vmatpush1.msra.mxu0 0.0
        %541 = vmatprep.subr.mxu0 0.0
        %542 = vmatpush1.msra.mxu0 0.0
        %543 = vmatprep.subr.mxu0 0.0
        %544 = vmatpush1.msra.mxu0 0.0
        %545 = vmatprep.subr.mxu0 0.0
        %546 = vmatpush1.msra.mxu0 0.0
        %547 = vmatprep.subr.mxu0 0.0
        %548 = vmatpush1.msra.mxu0 0.0
        %549 = vmatprep.subr.mxu0 0.0
        %550 = vmatpush1.msra.mxu0 0.0
        %551 = vmatprep.subr.mxu0 0.0
        %552 = vmatpush1.msra.mxu0 0.0
        %553 = vmatprep.subr.mxu0 0.0
        %554 = vmatpush1.msra.mxu0 0.0
        %555 = vmatprep.subr.mxu0 0.0
        %556 = vmatpush1.msra.mxu0 0.0
        %557 = vmatprep.subr.mxu0 0.0
        %558 = vmatpush1.msra.mxu0 0.0
        %559 = vmatprep.subr.mxu0 0.0
        %560 = vmatpush1.msra.mxu0 0.0
        %561 = vmatprep.subr.mxu0 0.0
        %562 = vmatpush1.msra.mxu0 0.0
        %563 = vmatprep.subr.mxu0 0.0
        %564 = vmatpush1.msra.mxu0 0.0
        %565 = vmatprep.subr.mxu0 0.0
        %566 = vmatpush1.msra.mxu0 0.0
        %567 = vmatprep.subr.mxu0 0.0
        %568 = vmatpush1.msra.mxu0 0.0
        %569 = vmatprep.subr.mxu0 0.0
        %570 = vmatpush1.msra.mxu0 0.0
        %571 = vmatprep.mubr.f32.mxu0 0.0
        %572 = vmatmul.mubr.f32.gmra.mrb[0].mxu0 %v265
        %v573 = vpop.f32.mrb[0].mxu0
        %v574 = vadd.f32 %v342, %v573
        %v575 = vpop.f32.mrb[0].mxu0
        %576 = vmatprep.mubr.f32.mxu0 0.0
        %577 = vmatmul.mubr.f32.gmra.mrb[0].mxu0 %v266
        %v578 = vpop.f32.mrb[0].mxu0
        %v579 = vadd.f32 %v342, %v578
        %v580 = vpop.f32.mrb[0].mxu0
        %581 = vmatprep.mubr.f32.mxu0 0.0
        %582 = vmatmul.mubr.f32.gmra.mrb[0].mxu0 %v267
        %v583 = vpop.f32.mrb[0].mxu0
        %v584 = vadd.f32 %v342, %v583
        %v585 = vpop.f32.mrb[0].mxu0
        %586 = vmatprep.mubr.f32.mxu0 0.0
        %587 = vmatmul.mubr.f32.gmra.mrb[0].mxu0 %v268
        %v588 = vpop.f32.mrb[0].mxu0
        %v589 = vadd.f32 %v342, %v588
        %v590 = vpop.f32.mrb[0].mxu0
        %591 = vmatprep.mubr.f32.mxu0 0.0
        %592 = vmatmul.mubr.f32.gmra.mrb[0].mxu0 %v269
        %v593 = vpop.f32.mrb[0].mxu0
        %v594 = vadd.f32 %v342, %v593
        %v595 = vpop.f32.mrb[0].mxu0
        %596 = vmatprep.mubr.f32.mxu0 0.0
        %597 = vmatmul.mubr.f32.gmra.mrb[0].mxu0 %v270
        %v598 = vpop.f32.mrb[0].mxu0
        %v599 = vadd.f32 %v342, %v598
        %v600 = vpop.f32.mrb[0].mxu0
        %601 = vmatprep.mubr.f32.mxu0 0.0
        %602 = vmatmul.mubr.f32.gmra.mrb[0].mxu0 %v271
        %v603 = vpop.f32.mrb[0].mxu0
        %v604 = vadd.f32 %v342, %v603
        %v605 = vpop.f32.mrb[0].mxu0
        %606 = vmatprep.mubr.f32.mxu0 0.0
        %607 = vmatmul.mubr.f32.gmra.mrb[0].mxu0 %v272
        %v608 = vpop.f32.mrb[0].mxu0
        %v609 = vadd.f32 %v342, %v608
        %v610 = vpop.f32.mrb[0].mxu0
        %611 = vmatprep.mubr.f32.mxu0 0.0
        %612 = vmatmul.mubr.f32.gmra.mrb[0].mxu0 %v273
        %v613 = vpop.f32.mrb[0].mxu0
        %v614 = vadd.f32 %v342, %v613
        %v615 = vpop.f32.mrb[0].mxu0
        %616 = vmatprep.mubr.f32.mxu0 0.0
        %617 = vmatmul.mubr.f32.gmra.mrb[0].mxu0 %v274
        %v618 = vpop.f32.mrb[0].mxu0
        %v619 = vadd.f32 %v342, %v618
        %v620 = vpop.f32.mrb[0].mxu0
        %621 = vmatprep.mubr.f32.mxu0 0.0
        %622 = vmatmul.mubr.f32.gmra.mrb[0].mxu0 %v275
        %v623 = vpop.f32.mrb[0].mxu0
        %v624 = vadd.f32 %v342, %v623
        %v625 = vpop.f32.mrb[0].mxu0
        %626 = vmatprep.mubr.f32.mxu0 0.0
        %627 = vmatmul.mubr.f32.gmra.mrb[0].mxu0 %v276
        %v628 = vpop.f32.mrb[0].mxu0
        %v629 = vadd.f32 %v342, %v628
        %v630 = vpop.f32.mrb[0].mxu0
        %631 = vmatprep.mubr.f32.mxu0 0.0
        %632 = vmatmul.mubr.f32.gmra.mrb[0].mxu0 %v277
        %v633 = vpop.f32.mrb[0].mxu0
        %v634 = vadd.f32 %v342, %v633
        %v635 = vpop.f32.mrb[0].mxu0
        %636 = vmatprep.mubr.f32.mxu0 0.0
        %637 = vmatmul.mubr.f32.gmra.mrb[0].mxu0 %v278
        %v638 = vpop.f32.mrb[0].mxu0
        %v639 = vadd.f32 %v342, %v638
        %v640 = vpop.f32.mrb[0].mxu0
        %641 = vmatprep.mubr.f32.mxu0 0.0
        %642 = vmatmul.mubr.f32.gmra.mrb[0].mxu0 %v279
        %v643 = vpop.f32.mrb[0].mxu0
        %v644 = vadd.f32 %v342, %v643
        %v645 = vpop.f32.mrb[0].mxu0
        %646 = vmatprep.mubr.f32.mxu0 0.0
        %647 = vmatmul.mubr.f32.gmra.mrb[0].mxu0 %v280
        %v648 = vpop.f32.mrb[0].mxu0
        %v649 = vadd.f32 %v342, %v648
        %v650 = vpop.f32.mrb[0].mxu0
        %651 = vdwg.mxu0
        %652 = vst [vmem:[%s254] sm:$0xff] %v413
        %653 = vst [vmem:[%s254 + $0x8] sm:$0xff] %v419
        %654 = vst [vmem:[%s254 + $0x10] sm:$0xff] %v425
        %655 = vst [vmem:[%s254 + $0x18] sm:$0xff] %v431
        %656 = vst [vmem:[%s254 + $0x20] sm:$0xff] %v437
        %657 = vst [vmem:[%s254 + $0x28] sm:$0xff] %v443
        %658 = vst [vmem:[%s254 + $0x30] sm:$0xff] %v449
        %659 = vst [vmem:[%s254 + $0x38] sm:$0xff] %v455
        %660 = vst [vmem:[%s254 + $0x40] sm:$0xff] %v461
        %661 = vst [vmem:[%s254 + $0x48] sm:$0xff] %v467
        %662 = vst [vmem:[%s254 + $0x50] sm:$0xff] %v473
        %663 = vst [vmem:[%s254 + $0x58] sm:$0xff] %v479
        %664 = vst [vmem:[%s254 + $0x60] sm:$0xff] %v485
        %665 = vst [vmem:[%s254 + $0x68] sm:$0xff] %v491
        %666 = vst [vmem:[%s254 + $0x70] sm:$0xff] %v497
        %667 = vst [vmem:[%s254 + $0x78] sm:$0xff] %v503
        %668 = vst [vmem:[%s261] sm:$0xff] %v415
        %669 = vst [vmem:[%s261 + $0x8] sm:$0xff] %v574
        %670 = vst [vmem:[%s261 + $0x10] sm:$0xff] %v421
        %671 = vst [vmem:[%s261 + $0x18] sm:$0xff] %v579
        %672 = vst [vmem:[%s261 + $0x20] sm:$0xff] %v427
        %673 = vst [vmem:[%s261 + $0x28] sm:$0xff] %v584
        %674 = vst [vmem:[%s261 + $0x30] sm:$0xff] %v433
        %675 = vst [vmem:[%s261 + $0x38] sm:$0xff] %v589
        %676 = vst [vmem:[%s261 + $0x40] sm:$0xff] %v439
        %677 = vst [vmem:[%s261 + $0x48] sm:$0xff] %v594
        %678 = vst [vmem:[%s261 + $0x50] sm:$0xff] %v445
        %679 = vst [vmem:[%s261 + $0x58] sm:$0xff] %v599
        %680 = vst [vmem:[%s261 + $0x60] sm:$0xff] %v451
        %681 = vst [vmem:[%s261 + $0x68] sm:$0xff] %v604
        %682 = vst [vmem:[%s261 + $0x70] sm:$0xff] %v457
        %683 = vst [vmem:[%s261 + $0x78] sm:$0xff] %v609
        %684 = vst [vmem:[%s261 + $0x80] sm:$0xff] %v463
        %685 = vst [vmem:[%s261 + $0x88] sm:$0xff] %v614
        %686 = vst [vmem:[%s261 + $0x90] sm:$0xff] %v469
        %687 = vst [vmem:[%s261 + $0x98] sm:$0xff] %v619
        %688 = vst [vmem:[%s261 + $0xa0] sm:$0xff] %v475
        %689 = vst [vmem:[%s261 + $0xa8] sm:$0xff] %v624
        %690 = vst [vmem:[%s261 + $0xb0] sm:$0xff] %v481
        %691 = vst [vmem:[%s261 + $0xb8] sm:$0xff] %v629
        %692 = vst [vmem:[%s261 + $0xc0] sm:$0xff] %v487
        %693 = vst [vmem:[%s261 + $0xc8] sm:$0xff] %v634
        %694 = vst [vmem:[%s261 + $0xd0] sm:$0xff] %v493
        %695 = vst [vmem:[%s261 + $0xd8] sm:$0xff] %v639
        %696 = vst [vmem:[%s261 + $0xe0] sm:$0xff] %v499
        %697 = vst [vmem:[%s261 + $0xe8] sm:$0xff] %v644
        %698 = vst [vmem:[%s261 + $0xf0] sm:$0xff] %v505
        %699 = vst [vmem:[%s261 + $0xf8] sm:$0xff] %v649
        %s700 = sand.u32 %s118, 1
        %s701 = scalar_lea.sflag [#allocation4], %s700
        %s702 = sand.u32 %s118, 1
        %s703 = smul.addr %s702, 128
        %s704 = scalar_lea.vmem [#allocation7], %s703
        %s705 = sand.u32 %s146, 1
        %s706 = scalar_lea.sflag [#allocation9], %s705
        %s707 = sand.u32 %s146, 1
        %s708 = smul.addr %s707, 256
        %s709 = scalar_lea.vmem [#allocation8], %s708
        // Predicated region
        $region41: #{tpu_custom_call.1} parent=31 // pred_check
          %p710 = pneg %p128
        $region42: #{tpu_custom_call.1} parent=31 // pred_check_branch
          %712 = sbr.rel (%p710) target = $region44
        $region43: #{tpu_custom_call.1} parent=31 // pred_region
          %s713 = smul.u32 16, %s31
          %s715 = ssub.s32 2048, 2048
          %716 = vsyncadd %s701, %s715
          %s717 = smul.addr %s30, 32
          %s718 = sadd.s32 %s713, %s717
          %s719 = smul.addr %s718, 128
          %s720 = scalar_lea.hbm %s3, %s719
          %s721 = sshll.u32 %s704, 4
          %s722 = int_to_ptr.vmem [resolvable:$true] %s721
          %727 = dma.vmem_to_hbm [thread:$0]  %s722, 2048, %s720, %s701, 128, 128, 8
        $region44: #{tpu_custom_call.1} parent=31 // pred_fallthru
          _
        // Predicated region
        $region45: #{tpu_custom_call.1} parent=31 // pred_check
          %p728 = pneg %p156
        $region46: #{tpu_custom_call.1} parent=31 // pred_check_branch
          %730 = sbr.rel (%p728) target = $region48
        $region47: #{tpu_custom_call.1} parent=31 // pred_region
          %s731 = smul.u32 16, %s31
          %s733 = ssub.s32 4096, 4096
          %734 = vsyncadd %s706, %s733
          %s735 = smul.addr %s731, 2
          %s736 = smul.addr %s30, 64
          %s737 = sadd.s32 %s735, %s736
          %s738 = smul.addr %s737, 128
          %s739 = scalar_lea.hbm %s4, %s738
          %s740 = sshll.u32 %s709, 4
          %s741 = int_to_ptr.vmem [resolvable:$true] %s740
          %746 = dma.vmem_to_hbm [thread:$0]  %s741, 4096, %s739, %s706, 256, 256, 16
        $region48: #{tpu_custom_call.1} parent=31 // pred_fallthru
          _
      $region32: #{tpu_custom_call.1} parent=5 // pred_fallthru
        _
      %p747 = scmp.le.s32.totalorder 2, %s21
      // Predicated region
      $region49: #{tpu_custom_call.1} parent=5 // pred_check
        %p748 = pneg %p747
      $region50: #{tpu_custom_call.1} parent=5 // pred_check_branch
        %750 = sbr.rel (%p748) target = $region52
      $region51: #{tpu_custom_call.1} parent=5 // pred_region
        %s751 = ssub.s32 %s21, 2
        // Predicated region
        $region53: #{tpu_custom_call.1} parent=51 // pred_check
          %p752 = pneg %p134
        $region54: #{tpu_custom_call.1} parent=51 // pred_check_branch
          %754 = sbr.rel (%p752) target = $region56
        $region55: #{tpu_custom_call.1} parent=51 // pred_region
          %s755 = sand.u32 %s119, 1
          %s756 = scalar_lea.sflag [#allocation4], %s755
          %s757 = sand.u32 %s119, 1
          %s758 = smul.addr %s757, 128
          %s759 = scalar_lea.vmem [#allocation7], %s758
          %760 = dma.done %s756, 2048
        $region56: #{tpu_custom_call.1} parent=51 // pred_fallthru
          _
        // Predicated region
        $region57: #{tpu_custom_call.1} parent=51 // pred_check
          %p761 = pneg %p162
        $region58: #{tpu_custom_call.1} parent=51 // pred_check_branch
          %763 = sbr.rel (%p761) target = $region60
        $region59: #{tpu_custom_call.1} parent=51 // pred_region
          %s764 = sand.u32 %s147, 1
          %s765 = scalar_lea.sflag [#allocation9], %s764
          %s766 = sand.u32 %s147, 1
          %s767 = smul.addr %s766, 256
          %s768 = scalar_lea.vmem [#allocation8], %s767
          %769 = dma.done %s765, 4096
        $region60: #{tpu_custom_call.1} parent=51 // pred_fallthru
          _
      $region52: #{tpu_custom_call.1} parent=5 // pred_fallthru
        _
    $region6: #{tpu_custom_call.1} parent=1 // loop_footer
      %s25 = sadd.s32 1, %s21
    $region7: #{tpu_custom_call.1} parent=1 // loop_footer_branch
      %20 = sbr.rel target = $region3
    $region8: #{tpu_custom_call.1} parent=1 // loop_exit
      _
    %770 = vsyncpa [#allocation3], 1
    %s771 = scalar_lea.sflag [#allocation3], 1
    %772 = vsyncpa %s771, 1
    %773 = vsyncpa [#allocation6], 1
    %774 = vsyncpa [#allocation4], 1
    %s775 = scalar_lea.sflag [#allocation4], 1
    %776 = vsyncpa %s775, 1
    %777 = vsyncpa [#allocation9], 1
    %s778 = scalar_lea.sflag [#allocation9], 1
    %779 = vsyncpa %s778, 1

</llo_original>
